<compile_context>
chip_gen: v7x
topology: tpu7x:2x2x1
jax: 0.10.0
libtpu: 0.0.40
codegen_flags: <defaults>
</compile_context>

<pallas_src>
import functools

import jax
import jax.numpy as jnp
from jax.experimental import pallas as pl
from jax.experimental.pallas import tpu as pltpu


def _hbm_copy_kernel(x_hbm_ref, o_hbm_ref, dma_sem):
    # Direct HBM -> HBM DMA of the full array: start, then block on completion.
    cp = pltpu.make_async_copy(x_hbm_ref, o_hbm_ref, dma_sem)
    cp.start()
    cp.wait()


def _pallas_identity(x):
    """Identity copy via a single HBM->HBM DMA (no VMEM staging)."""
    return pl.pallas_call(
        _hbm_copy_kernel,
        out_shape=jax.ShapeDtypeStruct(x.shape, x.dtype),
        # Leave both operands in place (raw HBM refs inside the kernel).
        in_specs=[pl.BlockSpec(memory_space=pl.ANY)],
        out_specs=pl.BlockSpec(memory_space=pl.ANY),
        scratch_shapes=[pltpu.SemaphoreType.DMA],
        compiler_params=pltpu.CompilerParams(has_side_effects=True),
    )(x)


@functools.partial(jax.jit, static_argnames=("inv_t", "dim"))
def base_transform_forward(x, inv_t: bool = False, dim: int = -1):
    """Identity 'forward' of the abstract BaseTransform, via a Pallas kernel.

    Args:
      x: array of shape (N, C, H, W) (NCHW), any dtype / any shape.
      inv_t, dim: accepted for API parity with the PyTorch signature; unused
        (no semantics in the abstract base class).
    Returns:
      array with identical shape/dtype/values as x.
    """
    del inv_t, dim
    return _pallas_identity(x)


if __name__ == "__main__":
    key = jax.random.PRNGKey(0)

    # Small NCHW input matching the module's implied layout.
    x = jax.random.normal(key, (2, 4, 16, 16), dtype=jnp.float32)
    y = jax.block_until_ready(base_transform_forward(x, inv_t=False, dim=-1))
    assert y.shape == x.shape and y.dtype == x.dtype
    assert bool(jnp.allclose(y, x)), "identity pass-through mismatch (f32)"

    # Odd-sized input (element count NOT a multiple of 128): the direct-DMA
    # path handles it without any padding/reshape fallback.
    x_odd = jax.random.normal(jax.random.PRNGKey(0), (2, 3, 17, 5),
                              dtype=jnp.float32)
    y_odd = jax.block_until_ready(base_transform_forward(x_odd))
    assert y_odd.shape == x_odd.shape and y_odd.dtype == x_odd.dtype
    assert bool(jnp.allclose(y_odd, x_odd)), "identity mismatch (odd shape)"

    # Larger bf16 input to exercise a bulk copy.
    x_big = jax.random.normal(jax.random.PRNGKey(0), (4, 16, 64, 128),
                              dtype=jnp.float32).astype(jnp.bfloat16)
    y_big = jax.block_until_ready(base_transform_forward(x_big))
    assert y_big.shape == x_big.shape and y_big.dtype == x_big.dtype
    assert bool(jnp.all(y_big == x_big)), "identity mismatch (bf16 bulk)"

    print("KERNEL_OK")
</pallas_src>

<mosaic_0001>
module attributes {stable_mosaic.version = 11 : i64} {
  func.func @_hbm_copy_kernel(%arg0: memref<2x4x16x16xf32, #tpu.memory_space<any>>, %arg1: memref<2x4x16x16xf32, #tpu.memory_space<any>>, %arg2: memref<!tpu.dma_semaphore, #tpu.memory_space<semaphore_mem>>) attributes {dimension_semantics = [], scalar_prefetch = 0 : i64, scratch_operands = 1 : i64, tpu.core_type = #tpu.core_type<tc>} {
    tpu.enqueue_dma source(%arg0 : memref<2x4x16x16xf32, #tpu.memory_space<any>>) target(%arg1 : memref<2x4x16x16xf32, #tpu.memory_space<any>>) target_semaphore(%arg2 : memref<!tpu.dma_semaphore, #tpu.memory_space<semaphore_mem>>)
    tpu.wait_dma2 semaphore(%arg2 : memref<!tpu.dma_semaphore, #tpu.memory_space<semaphore_mem>>) src(%arg0 : memref<2x4x16x16xf32, #tpu.memory_space<any>>) dst(%arg1 : memref<2x4x16x16xf32, #tpu.memory_space<any>>)
    return
  }
}

</mosaic_0001>

<llo_original>
// kernel: base_transform_forward.1
$region0: #{base_transform_forward.1}
  #allocation0 [shape = 'u32[]', space=smem, size = 0x4, offset = 0x4, fixed_abs, tag = 'smem constant byte address 0x4 - core index']
  #allocation1 [shape = 'u32[144,128]{1,0:T(1,128)}', space=vmem, size = 0x12000, scoped, tag = 'internal scratch']
  #allocation2 [shape = 's32[1]{0}', space=sflag, size = 0x4, scoped, tag = 'scratch operand']
  #allocation3 [shape = 's32[]', space=sflag, size = 0x4, offset = 0, fixed_abs, tag = 'sflag constant byte address 0x0 - dummy sync flag']
  #allocation4 [shape = 'u32[0]{0}', space=smem, size = 0, offset = 0, fixed_abs, tag = 'smem constant byte address 0x0 - null']
  %s0 = inlined_call_operand.hbm [shape: f32[2,4,16,16], index: 0, kind: input, shape index: {}]
  %s1 = inlined_call_operand.hbm [shape: f32[2,4,16,16], index: 1, kind: output, shape index: {}]
  %s2 = sld [smem:[#allocation0]]
  $region2: #{base_transform_forward.1} parent=0
    _
  %s4 = ssub.s32 1, %s2
  %s5 = scalar_select 0, %s4, %s2
  %s7 = sshll.u32 1, 14
  %s8 = sxor.u32 4294967295, %s7
  %s11 = sshll.u32 3, 24
  %s12 = sxor.u32 4294967295, %s11
  %s13 = sand.u32 0, %s12
  %s15 = sor.u32 %s13, 0
  %18 = dma.general %s0, 2048, %s1, [#allocation2], [#allocation3], [#allocation4], %s15, 0
  %s19 = smul.u32 2, 4
  %s20 = smul.u32 %s19, 16
  %s21 = smul.u32 %s20, 1
  %s22 = sshll.u32 %s21, 4
  %23 = dma.done [#allocation2], %s22
  %24 = vsyncmov [#allocation2]
  %s25 = vpop.sfrf %24
  %p26 = scmp.eq.s32.totalorder %s25, 0
  %p27 = pneg %p26
  %29 = shalt.err (%p27)

</llo_original>
